<compile_context>
chip_gen: v6e
topology: v6e:2x2x1
jax: 0.10.0
libtpu: 0.0.40
codegen_flags: <defaults>
</compile_context>

<pallas_src>
import jax
import jax.numpy as jnp
from jax.experimental import pallas as pl
from jax.experimental.pallas import tpu as pltpu


def _cat_mm_kernel(img_ref, w_ref, out_ref):
    # img_ref: (M, K) bf16, w_ref: (K, TN) bf16, out_ref: (3*M, TN) f32.
    m = img_ref.shape[0]
    acc = jnp.dot(img_ref[...], w_ref[...], preferred_element_type=jnp.float32)
    acc = acc.astype(out_ref.dtype)
    # Compute once, replicate via three aligned unmasked slice stores
    # (instead of a 3M x TN concatenate that would exceed the vreg file).
    out_ref[0 * m:1 * m, :] = acc
    out_ref[1 * m:2 * m, :] = acc
    out_ref[2 * m:3 * m, :] = acc


def cat_mm(img, fushion, *, compute_dtype=jnp.bfloat16, tn=128):
    """Computes concat([img@fushion, img@fushion, img@fushion], axis=1)."""
    B, M, K = img.shape
    K2, N = fushion.shape
    assert K == K2, "contraction dims must match"
    out_dtype = img.dtype

    # bf16 inputs: MXU-native on v5e/v6e/v7x, halves input HBM/DMA bytes.
    # Accumulation stays f32 inside the kernel; output stays f32.
    img_c = img.astype(compute_dtype)
    w_c = fushion.astype(compute_dtype)

    # Lane-dense N tiling so output stores stay unmasked full-width vst;
    # fall back to the full N extent if it does not divide evenly.
    if N % tn != 0:
        tn = N
    n_tiles = N // tn

    in_itemsize = jnp.dtype(compute_dtype).itemsize
    out_itemsize = jnp.dtype(out_dtype).itemsize
    flops = 2 * B * M * K * N  # matmul done once per batch element
    bytes_accessed = (B * M * K + K * N) * in_itemsize + 3 * B * M * N * out_itemsize

    return pl.pallas_call(
        _cat_mm_kernel,
        out_shape=jax.ShapeDtypeStruct((B, 3 * M, N), out_dtype),
        grid_spec=pltpu.PrefetchScalarGridSpec(
            num_scalar_prefetch=0,
            grid=(B, n_tiles),  # (batch, N tile); both independent
            in_specs=[
                # Leading batch dim squeezed -> kernel sees clean 2-D tiles.
                pl.BlockSpec((None, M, K), lambda b, j: (b, 0, 0)),
                pl.BlockSpec((K, tn), lambda b, j: (0, j)),
            ],
            out_specs=pl.BlockSpec((None, 3 * M, tn), lambda b, j: (b, 0, j)),
        ),
        compiler_params=pltpu.CompilerParams(
            dimension_semantics=("parallel", "parallel"),
        ),
        cost_estimate=pl.CostEstimate(
            flops=flops, transcendentals=0, bytes_accessed=bytes_accessed
        ),
    )(img_c, w_c)


if __name__ == "__main__":
    # Shapes consistent with the module's forward (K fixed so the matmul is
    # well-defined): img (1, 104, 400), fushion (400, 256) -> out (1, 312, 256).
    B, M, K, N = 1, 104, 400, 256
    key = jax.random.PRNGKey(0)
    k_img, k_w = jax.random.split(key)
    img = jax.random.normal(k_img, (B, M, K), dtype=jnp.float32)
    fushion = jax.random.normal(k_w, (K, N), dtype=jnp.float32)

    out = cat_mm(img, fushion)
    jax.block_until_ready(out)
    assert out.shape == (B, 3 * M, N)
    assert out.dtype == img.dtype

    # Tight check against a JAX reference using the same bf16 inputs with f32
    # accumulation (matches the kernel's MXU math).
    img_bf = img.astype(jnp.bfloat16)
    w_bf = fushion.astype(jnp.bfloat16)
    ref_one = jnp.einsum(
        "bmk,kn->bmn", img_bf, w_bf, preferred_element_type=jnp.float32
    )
    ref = jnp.concatenate([ref_one, ref_one, ref_one], axis=1)
    assert jnp.allclose(out, ref, atol=1e-2, rtol=1e-2)

    # Loose sanity check against the pure-f32 reference (only bf16 input
    # rounding separates them; K=400 f32 accumulation keeps it small).
    ref32_one = jnp.einsum("bmk,kn->bmn", img, fushion)
    ref32 = jnp.concatenate([ref32_one, ref32_one, ref32_one], axis=1)
    assert jnp.allclose(out, ref32, atol=1.0, rtol=0.05)

    # The three concatenated copies must be identical (compute-once semantics).
    assert jnp.array_equal(out[:, :M, :], out[:, M:2 * M, :])
    assert jnp.array_equal(out[:, :M, :], out[:, 2 * M:, :])

    print("KERNEL_OK")
</pallas_src>

<mosaic_0001>
module attributes {stable_mosaic.version = 11 : i64} {
  func.func @_cat_mm_kernel(%arg0: i32, %arg1: i32, %arg2: memref<1x104x400xbf16, #tpu.memory_space<vmem>>, %arg3: memref<400x128xbf16, #tpu.memory_space<vmem>>, %arg4: memref<1x312x128xf32, #tpu.memory_space<vmem>>) attributes {dimension_semantics = [#tpu.dimension_semantics<parallel>, #tpu.dimension_semantics<parallel>], iteration_bounds = array<i64: 1, 2>, scalar_prefetch = 0 : i64, scratch_operands = 0 : i64, tpu.core_type = #tpu.core_type<tc>, window_params = [{transform_indices = @transform_0, window_bounds = array<i64: 1, 104, 400>}, {transform_indices = @transform_1, window_bounds = array<i64: 400, 128>}, {transform_indices = @transform_2, window_bounds = array<i64: 1, 312, 128>}]} {
    %c0 = arith.constant 0 : index
    %c0_0 = arith.constant 0 : index
    %c0_1 = arith.constant 0 : index
    %0 = vector.load %arg2[%c0, %c0_0, %c0_1] : memref<1x104x400xbf16, #tpu.memory_space<vmem>>, vector<1x104x400xbf16>
    %1 = vector.shape_cast %0 : vector<1x104x400xbf16> to vector<104x400xbf16>
    %c0_2 = arith.constant 0 : index
    %c0_3 = arith.constant 0 : index
    %2 = vector.load %arg3[%c0_2, %c0_3] : memref<400x128xbf16, #tpu.memory_space<vmem>>, vector<400x128xbf16>
    %cst = arith.constant dense<0.000000e+00> : vector<104x128xf32>
    %3 = tpu.matmul %1, %2, %cst {dimension_numbers = #tpu.dot_dimension_numbers<[1], [0], [0], [1], [0, 0, 1, 1], [], []>} : vector<104x400xbf16>, vector<400x128xbf16>, vector<104x128xf32> -> vector<104x128xf32>
    %c0_4 = arith.constant 0 : index
    %c0_5 = arith.constant 0 : index
    %c0_6 = arith.constant 0 : index
    %4 = vector.load %arg4[%c0_4, %c0_5, %c0_6] : memref<1x312x128xf32, #tpu.memory_space<vmem>>, vector<1x104x128xf32>
    %5 = vector.shape_cast %4 : vector<1x104x128xf32> to vector<104x128xf32>
    %6 = vector.shape_cast %3 : vector<104x128xf32> to vector<1x104x128xf32>
    tpu.vector_store %arg4[%c0_4, %c0_5, %c0_6], %6 {strides = array<i32>} : memref<1x312x128xf32, #tpu.memory_space<vmem>>, vector<1x104x128xf32>,
    %c0_7 = arith.constant 0 : index
    %c104 = arith.constant 104 : index
    %c0_8 = arith.constant 0 : index
    %7 = vector.load %arg4[%c0_7, %c104, %c0_8] : memref<1x312x128xf32, #tpu.memory_space<vmem>>, vector<1x104x128xf32>
    %8 = vector.shape_cast %7 : vector<1x104x128xf32> to vector<104x128xf32>
    %9 = vector.shape_cast %3 : vector<104x128xf32> to vector<1x104x128xf32>
    tpu.vector_store %arg4[%c0_7, %c104, %c0_8], %9 {strides = array<i32>} : memref<1x312x128xf32, #tpu.memory_space<vmem>>, vector<1x104x128xf32>,
    %c0_9 = arith.constant 0 : index
    %c208 = arith.constant 208 : index
    %c0_10 = arith.constant 0 : index
    %10 = vector.load %arg4[%c0_9, %c208, %c0_10] : memref<1x312x128xf32, #tpu.memory_space<vmem>>, vector<1x104x128xf32>
    %11 = vector.shape_cast %10 : vector<1x104x128xf32> to vector<104x128xf32>
    %12 = vector.shape_cast %3 : vector<104x128xf32> to vector<1x104x128xf32>
    tpu.vector_store %arg4[%c0_9, %c208, %c0_10], %12 {strides = array<i32>} : memref<1x312x128xf32, #tpu.memory_space<vmem>>, vector<1x104x128xf32>,
    return
  }
  func.func @transform_0(%arg0: i32, %arg1: i32) -> (i32, i32, i32) {
    %c0_i32 = arith.constant 0 : i32
    %c0_i32_0 = arith.constant 0 : i32
    %c0_i32_1 = arith.constant 0 : i32
    return %arg0, %c0_i32, %c0_i32_0 : i32, i32, i32
  }
  func.func @transform_1(%arg0: i32, %arg1: i32) -> (i32, i32) {
    %c0_i32 = arith.constant 0 : i32
    %c0_i32_0 = arith.constant 0 : i32
    return %c0_i32, %arg1 : i32, i32
  }
  func.func @transform_2(%arg0: i32, %arg1: i32) -> (i32, i32, i32) {
    %c0_i32 = arith.constant 0 : i32
    %c0_i32_0 = arith.constant 0 : i32
    return %arg0, %c0_i32, %arg1 : i32, i32, i32
  }
}

</mosaic_0001>

<llo_original>
// kernel: tpu_custom_call.1
$region0: #{tpu_custom_call.1}
  #allocation0 [shape = 'u32[]', space=smem, size = 0x4, offset = 0x4, fixed_abs, tag = 'smem constant byte address 0x4 - core index']
  #allocation1 [shape = 'u32[144,128]{1,0:T(1,128)}', space=vmem, size = 0x12000, scoped, tag = 'internal scratch']
  %s0 = inlined_call_operand.vmem [shape: bf16[1,104,400], index: 0, kind: input, shape index: {}]
  %s1 = inlined_call_operand.vmem [shape: bf16[400,256], index: 1, kind: input, shape index: {}]
  %s2 = inlined_call_operand.hbm [shape: f32[1,312,256], index: 2, kind: output, shape index: {}]
  %s3 = sld [smem:[#allocation0]]
  $region82: #{tpu_custom_call.1} parent=0
    _
  %s5 = ssub.s32 1, %s3
  %s6 = scalar_select 0, %s5, %s3
  $region1: #{tpu_custom_call.1} parent=0
    #allocation2 [shape = 'u8[204800]{0}', space=vmem, size = 0x32000, scoped, tag = 'input window, operand 1']
    #allocation3 [shape = 'u8[319488]{0}', space=vmem, size = 0x4e000, scoped, tag = 'output window, operand 0']
    #allocation4 [shape = 's32[2]{0}', space=sflag, size = 0x8, scoped, tag = 'scoped memory for tpu_custom_call.1']
    %7 = vsyncpa [#allocation4], 0
    %s8 = scalar_lea.sflag [#allocation4], 1
    %9 = vsyncpa %s8, 0
    loop: start=0, step=1, limit=4
    $region2: #{tpu_custom_call.1} parent=1 // loop_pre_header
      _
    $region3: #{tpu_custom_call.1} parent=1 // loop_header
      %s11 = sphi 0, %s15
      %p12 = scmp.ge.s32.totalorder %s11, 4
      %s18 = sphi 0, %s30
      %s19 = sphi 0, %s26
      %s20 = sphi 0, %s18
      %s21 = sphi 0, %s19
      %s22 = sphi 0, %s20
      %s23 = sphi 0, %s21
      %s33 = sphi 0, %s35
      %s36 = sphi 0, %s33
      %s37 = sphi 0, %s36
      %s53 = sphi 0, %s37
      %s59 = sphi 0, %s61
      %s62 = sphi 0, %s59
      %s63 = sphi 0, %s62
      %s79 = sphi 0, %s63
      %s87 = sphi 0, %s89
      %s90 = sphi 0, %s87
      %s91 = sphi 0, %s90
      %s107 = sphi 0, %s91
    $region4: #{tpu_custom_call.1} parent=1 // loop_header_branch
      %14 = sbr.rel (%p12) target = $region8
    $region5: #{tpu_custom_call.1} parent=1 // loop_body
      %s16 = ssub.s32 %s11, 1
      %s17 = ssub.s32 %s11, 2
      %s24 = sadd.s32 1, %s19
      %p25 = scmp.ge.s32.totalorder %s24, 2
      %s26 = scalar_select %p25, 0, %s24
      %s27 = sadd.s32 1, %s18
      %s28 = scalar_select %p25, %s27, %s18
      %p29 = scmp.ge.s32.totalorder %s28, 1
      %s30 = scalar_select %p29, 0, %s28
      %s31 = ssub.s32 %s18, %s30
      %p32 = scmp.eq.s32.totalorder %s31, 0
      %s34 = sadd.s32 %s33, 1
      %s35 = scalar_select %p32, %s33, %s34
      %p38 = pneg %p32
      %p39 = scmp.eq.s32.totalorder %s11, 1
      %p40 = por %p38, %p39
      %p41 = scmp.ne.s32.totalorder %s33, %s36
      %p42 = scmp.eq.s32.totalorder %s11, 0
      %p43 = por %p41, %p42
      %p44 = scmp.ne.s32.totalorder %s33, %s36
      %p45 = scmp.eq.s32.totalorder %s16, 1
      %p46 = por %p44, %p45
      %p47 = scmp.ne.s32.totalorder %s36, %s37
      %p48 = scmp.eq.s32.totalorder %s16, 0
      %p49 = por %p47, %p48
      %p50 = scmp.ne.s32.totalorder %s36, %s37
      %p51 = scmp.eq.s32.totalorder %s17, 1
      %p52 = por %p50, %p51
      %p54 = scmp.ne.s32.totalorder %s37, %s53
      %p55 = scmp.eq.s32.totalorder %s17, 0
      %p56 = por %p54, %p55
      %s57 = ssub.s32 %s19, %s26
      %p58 = scmp.eq.s32.totalorder %s57, 0
      %s60 = sadd.s32 %s59, 1
      %s61 = scalar_select %p58, %s59, %s60
      %p64 = pneg %p58
      %p65 = scmp.eq.s32.totalorder %s11, 1
      %p66 = por %p64, %p65
      %p67 = scmp.ne.s32.totalorder %s59, %s62
      %p68 = scmp.eq.s32.totalorder %s11, 0
      %p69 = por %p67, %p68
      %p70 = scmp.ne.s32.totalorder %s59, %s62
      %p71 = scmp.eq.s32.totalorder %s16, 1
      %p72 = por %p70, %p71
      %p73 = scmp.ne.s32.totalorder %s62, %s63
      %p74 = scmp.eq.s32.totalorder %s16, 0
      %p75 = por %p73, %p74
      %p76 = scmp.ne.s32.totalorder %s62, %s63
      %p77 = scmp.eq.s32.totalorder %s17, 1
      %p78 = por %p76, %p77
      %p80 = scmp.ne.s32.totalorder %s63, %s79
      %p81 = scmp.eq.s32.totalorder %s17, 0
      %p82 = por %p80, %p81
      %s83 = ssub.s32 %s18, %s30
      %s84 = ssub.s32 %s19, %s26
      %s85 = sor.u32 %s83, %s84
      %p86 = scmp.eq.s32.totalorder %s85, 0
      %s88 = sadd.s32 %s87, 1
      %s89 = scalar_select %p86, %s87, %s88
      %p92 = pneg %p86
      %p93 = scmp.eq.s32.totalorder %s11, 1
      %p94 = por %p92, %p93
      %p95 = scmp.ne.s32.totalorder %s87, %s90
      %p96 = scmp.eq.s32.totalorder %s11, 0
      %p97 = por %p95, %p96
      %p98 = scmp.ne.s32.totalorder %s87, %s90
      %p99 = scmp.eq.s32.totalorder %s16, 1
      %p100 = por %p98, %p99
      %p101 = scmp.ne.s32.totalorder %s90, %s91
      %p102 = scmp.eq.s32.totalorder %s16, 0
      %p103 = por %p101, %p102
      %p104 = scmp.ne.s32.totalorder %s90, %s91
      %p105 = scmp.eq.s32.totalorder %s17, 1
      %p106 = por %p104, %p105
      %p108 = scmp.ne.s32.totalorder %s91, %s107
      %p109 = scmp.eq.s32.totalorder %s17, 0
      %p110 = por %p108, %p109
      %p111 = scmp.le.s32.totalorder 1, %s11
      %p112 = scmp.lt.s32.totalorder %s11, 3
      %p113 = pnand %p111, %p112
      %p114 = pneg %p113
      // Predicated region
      $region9: #{tpu_custom_call.1} parent=5 // pred_check
        _
      $region10: #{tpu_custom_call.1} parent=5 // pred_check_branch
        %116 = sbr.rel (%p113) target = $region12
      $region11: #{tpu_custom_call.1} parent=5 // pred_region
        %s117 = ssub.s32 %s11, 1
        // Predicated region
        $region13: #{tpu_custom_call.1} parent=11 // pred_check
          %p118 = pneg %p49
        $region14: #{tpu_custom_call.1} parent=11 // pred_check_branch
          %120 = sbr.rel (%p118) target = $region16
        $region15: #{tpu_custom_call.1} parent=11 // pred_region
          %p121 = scmp.lt.s32.totalorder %s20, 0
          %s122 = scalar_select %p121, %s20, 0
          %s123 = smul.addr %s122, 52
          %s124 = smul.addr %s123, 4
          %s125 = scalar_lea.vmem %s0, %s124
        $region16: #{tpu_custom_call.1} parent=11 // pred_fallthru
          _
      $region12: #{tpu_custom_call.1} parent=5 // pred_fallthru
        _
      %p126 = scmp.lt.s32.totalorder %s11, 2
      // Predicated region
      $region17: #{tpu_custom_call.1} parent=5 // pred_check
        %p127 = pneg %p126
      $region18: #{tpu_custom_call.1} parent=5 // pred_check_branch
        %129 = sbr.rel (%p127) target = $region20
      $region19: #{tpu_custom_call.1} parent=5 // pred_region
        // Predicated region
        $region21: #{tpu_custom_call.1} parent=19 // pred_check
          %p130 = pneg %p69
        $region22: #{tpu_custom_call.1} parent=19 // pred_check_branch
          %132 = sbr.rel (%p130) target = $region24
        $region23: #{tpu_custom_call.1} parent=19 // pred_region
          %s133 = sand.u32 %s59, 1
          %s134 = sand.u32 %s59, 1
          %s135 = smul.addr %s134, 200
          %s136 = scalar_lea.vmem [#allocation2], %s135
          %s137 = smul.addr %s19, 4
          %s138 = scalar_lea.vmem %s1, %s137
          // Predicated region
          $region25: #{tpu_custom_call.1} parent=23 // pred_check
            _
          $region26: #{tpu_custom_call.1} parent=23 // pred_check_branch
            %140 = sbr.rel (0) target = $region28
          $region27: #{tpu_custom_call.1} parent=23 // pred_region
            // Predicated region
            $region29: #{tpu_custom_call.1} parent=27 // pred_check
              _
            $region30: #{tpu_custom_call.1} parent=27 // pred_check_branch
              %142 = sbr.rel target = $region32
            $region31: #{tpu_custom_call.1} parent=27 // pred_region
              // Predicated region
              $region44: #{tpu_custom_call.1} parent=31 // pred_check
                _
              $region45: #{tpu_custom_call.1} parent=31 // pred_check_branch
                %256 = sbr.rel (0) target = $region47
              $region46: #{tpu_custom_call.1} parent=31 // pred_region
                loop: start=0, step=1, limit=1
                $region48: #{tpu_custom_call.1} parent=46 // loop_pre_header
                  _
                $region49: #{tpu_custom_call.1} parent=46 // loop_header
                  %s258 = sphi 0, %s262
                  %p259 = scmp.ge.s32.totalorder %s258, 1
                  %s263 = sphi %s138, %s138
                  %s264 = sphi %s136, %s136
                $region50: #{tpu_custom_call.1} parent=46 // loop_header_branch
                  %261 = sbr.rel (%p259) target = $region54
                $region51: #{tpu_custom_call.1} parent=46 // loop_body
                  _
                $region52: #{tpu_custom_call.1} parent=46 // loop_footer
                  %s262 = sadd.s32 1, %s258
                $region53: #{tpu_custom_call.1} parent=46 // loop_footer_branch
                  %257 = sbr.rel target = $region49
                $region54: #{tpu_custom_call.1} parent=46 // loop_exit
                  _
                %s266 = ssub.s32 16, 1
                loop: start=0, step=1, limit=1
                $region55: #{tpu_custom_call.1} parent=46 // loop_pre_header
                  _
                $region56: #{tpu_custom_call.1} parent=46 // loop_header
                  %s268 = sphi 0, %s272
                  %p269 = scmp.ge.s32.totalorder %s268, 1
                  %s273 = sphi %s138, %s138
                  %s274 = sphi %s136, %s136
                $region57: #{tpu_custom_call.1} parent=46 // loop_header_branch
                  %271 = sbr.rel (%p269) target = $region61
                $region58: #{tpu_custom_call.1} parent=46 // loop_body
                  %v275 = vld [vmem:[%s273] sm:%s266]
                  %276 = vst [vmem:[%s274] sm:%s266] %v275
                  %v277 = vld [vmem:[%s273 + $0x8] sm:%s266]
                  %278 = vst [vmem:[%s274 + $0x4] sm:%s266] %v277
                  %v279 = vld [vmem:[%s273 + $0x10] sm:%s266]
                  %280 = vst [vmem:[%s274 + $0x8] sm:%s266] %v279
                  %v281 = vld [vmem:[%s273 + $0x18] sm:%s266]
                  %282 = vst [vmem:[%s274 + $0xc] sm:%s266] %v281
                  %v283 = vld [vmem:[%s273 + $0x20] sm:%s266]
                  %284 = vst [vmem:[%s274 + $0x10] sm:%s266] %v283
                  %v285 = vld [vmem:[%s273 + $0x28] sm:%s266]
                  %286 = vst [vmem:[%s274 + $0x14] sm:%s266] %v285
                  %v287 = vld [vmem:[%s273 + $0x30] sm:%s266]
                  %288 = vst [vmem:[%s274 + $0x18] sm:%s266] %v287
                  %v289 = vld [vmem:[%s273 + $0x38] sm:%s266]
                  %290 = vst [vmem:[%s274 + $0x1c] sm:%s266] %v289
                  %v291 = vld [vmem:[%s273 + $0x40] sm:%s266]
                  %292 = vst [vmem:[%s274 + $0x20] sm:%s266] %v291
                  %v293 = vld [vmem:[%s273 + $0x48] sm:%s266]
                  %294 = vst [vmem:[%s274 + $0x24] sm:%s266] %v293
                  %v295 = vld [vmem:[%s273 + $0x50] sm:%s266]
                  %296 = vst [vmem:[%s274 + $0x28] sm:%s266] %v295
                  %v297 = vld [vmem:[%s273 + $0x58] sm:%s266]
                  %298 = vst [vmem:[%s274 + $0x2c] sm:%s266] %v297
                  %v299 = vld [vmem:[%s273 + $0x60] sm:%s266]
                  %300 = vst [vmem:[%s274 + $0x30] sm:%s266] %v299
                  %v301 = vld [vmem:[%s273 + $0x68] sm:%s266]
                  %302 = vst [vmem:[%s274 + $0x34] sm:%s266] %v301
                  %v303 = vld [vmem:[%s273 + $0x70] sm:%s266]
                  %304 = vst [vmem:[%s274 + $0x38] sm:%s266] %v303
                  %v305 = vld [vmem:[%s273 + $0x78] sm:%s266]
                  %306 = vst [vmem:[%s274 + $0x3c] sm:%s266] %v305
                  %v307 = vld [vmem:[%s273 + $0x80] sm:%s266]
                  %308 = vst [vmem:[%s274 + $0x40] sm:%s266] %v307
                  %v309 = vld [vmem:[%s273 + $0x88] sm:%s266]
                  %310 = vst [vmem:[%s274 + $0x44] sm:%s266] %v309
                  %v311 = vld [vmem:[%s273 + $0x90] sm:%s266]
                  %312 = vst [vmem:[%s274 + $0x48] sm:%s266] %v311
                  %v313 = vld [vmem:[%s273 + $0x98] sm:%s266]
                  %314 = vst [vmem:[%s274 + $0x4c] sm:%s266] %v313
                  %v315 = vld [vmem:[%s273 + $0xa0] sm:%s266]
                  %316 = vst [vmem:[%s274 + $0x50] sm:%s266] %v315
                  %v317 = vld [vmem:[%s273 + $0xa8] sm:%s266]
                  %318 = vst [vmem:[%s274 + $0x54] sm:%s266] %v317
                  %v319 = vld [vmem:[%s273 + $0xb0] sm:%s266]
                  %320 = vst [vmem:[%s274 + $0x58] sm:%s266] %v319
                  %v321 = vld [vmem:[%s273 + $0xb8] sm:%s266]
                  %322 = vst [vmem:[%s274 + $0x5c] sm:%s266] %v321
                  %v323 = vld [vmem:[%s273 + $0xc0] sm:%s266]
                  %324 = vst [vmem:[%s274 + $0x60] sm:%s266] %v323
                  %v325 = vld [vmem:[%s273 + $0xc8] sm:%s266]
                  %326 = vst [vmem:[%s274 + $0x64] sm:%s266] %v325
                  %v327 = vld [vmem:[%s273 + $0xd0] sm:%s266]
                  %328 = vst [vmem:[%s274 + $0x68] sm:%s266] %v327
                  %v329 = vld [vmem:[%s273 + $0xd8] sm:%s266]
                  %330 = vst [vmem:[%s274 + $0x6c] sm:%s266] %v329
                  %v331 = vld [vmem:[%s273 + $0xe0] sm:%s266]
                  %332 = vst [vmem:[%s274 + $0x70] sm:%s266] %v331
                  %v333 = vld [vmem:[%s273 + $0xe8] sm:%s266]
                  %334 = vst [vmem:[%s274 + $0x74] sm:%s266] %v333
                  %v335 = vld [vmem:[%s273 + $0xf0] sm:%s266]
                  %336 = vst [vmem:[%s274 + $0x78] sm:%s266] %v335
                  %v337 = vld [vmem:[%s273 + $0xf8] sm:%s266]
                  %338 = vst [vmem:[%s274 + $0x7c] sm:%s266] %v337
                  %v339 = vld [vmem:[%s273 + $0x100] sm:%s266]
                  %340 = vst [vmem:[%s274 + $0x80] sm:%s266] %v339
                  %v341 = vld [vmem:[%s273 + $0x108] sm:%s266]
                  %342 = vst [vmem:[%s274 + $0x84] sm:%s266] %v341
                  %v343 = vld [vmem:[%s273 + $0x110] sm:%s266]
                  %344 = vst [vmem:[%s274 + $0x88] sm:%s266] %v343
                  %v345 = vld [vmem:[%s273 + $0x118] sm:%s266]
                  %346 = vst [vmem:[%s274 + $0x8c] sm:%s266] %v345
                  %v347 = vld [vmem:[%s273 + $0x120] sm:%s266]
                  %348 = vst [vmem:[%s274 + $0x90] sm:%s266] %v347
                  %v349 = vld [vmem:[%s273 + $0x128] sm:%s266]
                  %350 = vst [vmem:[%s274 + $0x94] sm:%s266] %v349
                  %v351 = vld [vmem:[%s273 + $0x130] sm:%s266]
                  %352 = vst [vmem:[%s274 + $0x98] sm:%s266] %v351
                  %v353 = vld [vmem:[%s273 + $0x138] sm:%s266]
                  %354 = vst [vmem:[%s274 + $0x9c] sm:%s266] %v353
                  %v355 = vld [vmem:[%s273 + $0x140] sm:%s266]
                  %356 = vst [vmem:[%s274 + $0xa0] sm:%s266] %v355
                  %v357 = vld [vmem:[%s273 + $0x148] sm:%s266]
                  %358 = vst [vmem:[%s274 + $0xa4] sm:%s266] %v357
                  %v359 = vld [vmem:[%s273 + $0x150] sm:%s266]
                  %360 = vst [vmem:[%s274 + $0xa8] sm:%s266] %v359
                  %v361 = vld [vmem:[%s273 + $0x158] sm:%s266]
                  %362 = vst [vmem:[%s274 + $0xac] sm:%s266] %v361
                  %v363 = vld [vmem:[%s273 + $0x160] sm:%s266]
                  %364 = vst [vmem:[%s274 + $0xb0] sm:%s266] %v363
                  %v365 = vld [vmem:[%s273 + $0x168] sm:%s266]
                  %366 = vst [vmem:[%s274 + $0xb4] sm:%s266] %v365
                  %v367 = vld [vmem:[%s273 + $0x170] sm:%s266]
                  %368 = vst [vmem:[%s274 + $0xb8] sm:%s266] %v367
                  %v369 = vld [vmem:[%s273 + $0x178] sm:%s266]
                  %370 = vst [vmem:[%s274 + $0xbc] sm:%s266] %v369
                  %v371 = vld [vmem:[%s273 + $0x180] sm:%s266]
                  %372 = vst [vmem:[%s274 + $0xc0] sm:%s266] %v371
                  %v373 = vld [vmem:[%s273 + $0x188] sm:%s266]
                  %374 = vst [vmem:[%s274 + $0xc4] sm:%s266] %v373
                $region59: #{tpu_custom_call.1} parent=46 // loop_footer
                  %s272 = sadd.s32 1, %s268
                $region60: #{tpu_custom_call.1} parent=46 // loop_footer_branch
                  %267 = sbr.rel target = $region56
                $region61: #{tpu_custom_call.1} parent=46 // loop_exit
                  _
              $region47: #{tpu_custom_call.1} parent=31 // pred_fallthru
                _
            $region32: #{tpu_custom_call.1} parent=27 // pred_fallthru
              _
            // Predicated region
            $region33: #{tpu_custom_call.1} parent=27 // pred_check
              _
            $region34: #{tpu_custom_call.1} parent=27 // pred_check_branch
              %144 = sbr.rel (0) target = $region36
            $region35: #{tpu_custom_call.1} parent=27 // pred_region
              %s146 = ssub.s32 16, 1
              loop: start=0, step=1, limit=1
              $region37: #{tpu_custom_call.1} parent=35 // loop_pre_header
                _
              $region38: #{tpu_custom_call.1} parent=35 // loop_header
                %s148 = sphi 0, %s152
                %p149 = scmp.ge.s32.totalorder %s148, 1
                %s153 = sphi %s138, %s138
                %s154 = sphi %s136, %s136
              $region39: #{tpu_custom_call.1} parent=35 // loop_header_branch
                %151 = sbr.rel (%p149) target = $region43
              $region40: #{tpu_custom_call.1} parent=35 // loop_body
                %v155 = vld [vmem:[%s153] sm:%s146]
                %156 = vst [vmem:[%s154] sm:%s146] %v155
                %v157 = vld [vmem:[%s153 + $0x8] sm:%s146]
                %158 = vst [vmem:[%s154 + $0x4] sm:%s146] %v157
                %v159 = vld [vmem:[%s153 + $0x10] sm:%s146]
                %160 = vst [vmem:[%s154 + $0x8] sm:%s146] %v159
                %v161 = vld [vmem:[%s153 + $0x18] sm:%s146]
                %162 = vst [vmem:[%s154 + $0xc] sm:%s146] %v161
                %v163 = vld [vmem:[%s153 + $0x20] sm:%s146]
                %164 = vst [vmem:[%s154 + $0x10] sm:%s146] %v163
                %v165 = vld [vmem:[%s153 + $0x28] sm:%s146]
                %166 = vst [vmem:[%s154 + $0x14] sm:%s146] %v165
                %v167 = vld [vmem:[%s153 + $0x30] sm:%s146]
                %168 = vst [vmem:[%s154 + $0x18] sm:%s146] %v167
                %v169 = vld [vmem:[%s153 + $0x38] sm:%s146]
                %170 = vst [vmem:[%s154 + $0x1c] sm:%s146] %v169
                %v171 = vld [vmem:[%s153 + $0x40] sm:%s146]
                %172 = vst [vmem:[%s154 + $0x20] sm:%s146] %v171
                %v173 = vld [vmem:[%s153 + $0x48] sm:%s146]
                %174 = vst [vmem:[%s154 + $0x24] sm:%s146] %v173
                %v175 = vld [vmem:[%s153 + $0x50] sm:%s146]
                %176 = vst [vmem:[%s154 + $0x28] sm:%s146] %v175
                %v177 = vld [vmem:[%s153 + $0x58] sm:%s146]
                %178 = vst [vmem:[%s154 + $0x2c] sm:%s146] %v177
                %v179 = vld [vmem:[%s153 + $0x60] sm:%s146]
                %180 = vst [vmem:[%s154 + $0x30] sm:%s146] %v179
                %v181 = vld [vmem:[%s153 + $0x68] sm:%s146]
                %182 = vst [vmem:[%s154 + $0x34] sm:%s146] %v181
                %v183 = vld [vmem:[%s153 + $0x70] sm:%s146]
                %184 = vst [vmem:[%s154 + $0x38] sm:%s146] %v183
                %v185 = vld [vmem:[%s153 + $0x78] sm:%s146]
                %186 = vst [vmem:[%s154 + $0x3c] sm:%s146] %v185
                %v187 = vld [vmem:[%s153 + $0x80] sm:%s146]
                %188 = vst [vmem:[%s154 + $0x40] sm:%s146] %v187
                %v189 = vld [vmem:[%s153 + $0x88] sm:%s146]
                %190 = vst [vmem:[%s154 + $0x44] sm:%s146] %v189
                %v191 = vld [vmem:[%s153 + $0x90] sm:%s146]
                %192 = vst [vmem:[%s154 + $0x48] sm:%s146] %v191
                %v193 = vld [vmem:[%s153 + $0x98] sm:%s146]
                %194 = vst [vmem:[%s154 + $0x4c] sm:%s146] %v193
                %v195 = vld [vmem:[%s153 + $0xa0] sm:%s146]
                %196 = vst [vmem:[%s154 + $0x50] sm:%s146] %v195
                %v197 = vld [vmem:[%s153 + $0xa8] sm:%s146]
                %198 = vst [vmem:[%s154 + $0x54] sm:%s146] %v197
                %v199 = vld [vmem:[%s153 + $0xb0] sm:%s146]
                %200 = vst [vmem:[%s154 + $0x58] sm:%s146] %v199
                %v201 = vld [vmem:[%s153 + $0xb8] sm:%s146]
                %202 = vst [vmem:[%s154 + $0x5c] sm:%s146] %v201
                %v203 = vld [vmem:[%s153 + $0xc0] sm:%s146]
                %204 = vst [vmem:[%s154 + $0x60] sm:%s146] %v203
                %v205 = vld [vmem:[%s153 + $0xc8] sm:%s146]
                %206 = vst [vmem:[%s154 + $0x64] sm:%s146] %v205
                %v207 = vld [vmem:[%s153 + $0xd0] sm:%s146]
                %208 = vst [vmem:[%s154 + $0x68] sm:%s146] %v207
                %v209 = vld [vmem:[%s153 + $0xd8] sm:%s146]
                %210 = vst [vmem:[%s154 + $0x6c] sm:%s146] %v209
                %v211 = vld [vmem:[%s153 + $0xe0] sm:%s146]
                %212 = vst [vmem:[%s154 + $0x70] sm:%s146] %v211
                %v213 = vld [vmem:[%s153 + $0xe8] sm:%s146]
                %214 = vst [vmem:[%s154 + $0x74] sm:%s146] %v213
                %v215 = vld [vmem:[%s153 + $0xf0] sm:%s146]
                %216 = vst [vmem:[%s154 + $0x78] sm:%s146] %v215
                %v217 = vld [vmem:[%s153 + $0xf8] sm:%s146]
                %218 = vst [vmem:[%s154 + $0x7c] sm:%s146] %v217
                %v219 = vld [vmem:[%s153 + $0x100] sm:%s146]
                %220 = vst [vmem:[%s154 + $0x80] sm:%s146] %v219
                %v221 = vld [vmem:[%s153 + $0x108] sm:%s146]
                %222 = vst [vmem:[%s154 + $0x84] sm:%s146] %v221
                %v223 = vld [vmem:[%s153 + $0x110] sm:%s146]
                %224 = vst [vmem:[%s154 + $0x88] sm:%s146] %v223
                %v225 = vld [vmem:[%s153 + $0x118] sm:%s146]
                %226 = vst [vmem:[%s154 + $0x8c] sm:%s146] %v225
                %v227 = vld [vmem:[%s153 + $0x120] sm:%s146]
                %228 = vst [vmem:[%s154 + $0x90] sm:%s146] %v227
                %v229 = vld [vmem:[%s153 + $0x128] sm:%s146]
                %230 = vst [vmem:[%s154 + $0x94] sm:%s146] %v229
                %v231 = vld [vmem:[%s153 + $0x130] sm:%s146]
                %232 = vst [vmem:[%s154 + $0x98] sm:%s146] %v231
                %v233 = vld [vmem:[%s153 + $0x138] sm:%s146]
                %234 = vst [vmem:[%s154 + $0x9c] sm:%s146] %v233
                %v235 = vld [vmem:[%s153 + $0x140] sm:%s146]
                %236 = vst [vmem:[%s154 + $0xa0] sm:%s146] %v235
                %v237 = vld [vmem:[%s153 + $0x148] sm:%s146]
                %238 = vst [vmem:[%s154 + $0xa4] sm:%s146] %v237
                %v239 = vld [vmem:[%s153 + $0x150] sm:%s146]
                %240 = vst [vmem:[%s154 + $0xa8] sm:%s146] %v239
                %v241 = vld [vmem:[%s153 + $0x158] sm:%s146]
                %242 = vst [vmem:[%s154 + $0xac] sm:%s146] %v241
                %v243 = vld [vmem:[%s153 + $0x160] sm:%s146]
                %244 = vst [vmem:[%s154 + $0xb0] sm:%s146] %v243
                %v245 = vld [vmem:[%s153 + $0x168] sm:%s146]
                %246 = vst [vmem:[%s154 + $0xb4] sm:%s146] %v245
                %v247 = vld [vmem:[%s153 + $0x170] sm:%s146]
                %248 = vst [vmem:[%s154 + $0xb8] sm:%s146] %v247
                %v249 = vld [vmem:[%s153 + $0x178] sm:%s146]
                %250 = vst [vmem:[%s154 + $0xbc] sm:%s146] %v249
                %v251 = vld [vmem:[%s153 + $0x180] sm:%s146]
                %252 = vst [vmem:[%s154 + $0xc0] sm:%s146] %v251
                %v253 = vld [vmem:[%s153 + $0x188] sm:%s146]
                %254 = vst [vmem:[%s154 + $0xc4] sm:%s146] %v253
              $region41: #{tpu_custom_call.1} parent=35 // loop_footer
                %s152 = sadd.s32 1, %s148
              $region42: #{tpu_custom_call.1} parent=35 // loop_footer_branch
                %147 = sbr.rel target = $region38
              $region43: #{tpu_custom_call.1} parent=35 // loop_exit
                _
            $region36: #{tpu_custom_call.1} parent=27 // pred_fallthru
              _
          $region28: #{tpu_custom_call.1} parent=23 // pred_fallthru
            _
          %375 = vnop
        $region24: #{tpu_custom_call.1} parent=19 // pred_fallthru
          _
      $region20: #{tpu_custom_call.1} parent=5 // pred_fallthru
        _
      %p376 = scmp.le.s32.totalorder 1, %s11
      %p377 = scmp.lt.s32.totalorder %s11, 3
      %p378 = pnand %p376, %p377
      %p379 = pneg %p378
      // Predicated region
      $region62: #{tpu_custom_call.1} parent=5 // pred_check
        _
      $region63: #{tpu_custom_call.1} parent=5 // pred_check_branch
        %381 = sbr.rel (%p378) target = $region65
      $region64: #{tpu_custom_call.1} parent=5 // pred_region
        %s382 = ssub.s32 %s11, 1
        %s383 = sand.u32 %s62, 1
        %s384 = sand.u32 %s62, 1
        %s385 = smul.addr %s384, 200
        %s386 = scalar_lea.vmem [#allocation2], %s385
        // Predicated region
        $region66: #{tpu_custom_call.1} parent=64 // pred_check
          %p387 = pneg %p75
        $region67: #{tpu_custom_call.1} parent=64 // pred_check_branch
          %389 = sbr.rel (%p387) target = $region69
        $region68: #{tpu_custom_call.1} parent=64 // pred_region
          _
        $region69: #{tpu_custom_call.1} parent=64 // pred_fallthru
          _
        %p390 = scmp.lt.s32.totalorder %s20, 0
        %s391 = scalar_select %p390, %s20, 0
        %s392 = smul.addr %s391, 52
        %s393 = smul.addr %s392, 4
        %s394 = scalar_lea.vmem %s0, %s393
        %p395 = pneg %p49
        %p396 = pneg %p46
        %s397 = sand.u32 %s62, 1
        %s398 = sand.u32 %s62, 1
        %s399 = smul.addr %s398, 200
        %s400 = scalar_lea.vmem [#allocation2], %s399
        %p401 = pneg %p75
        %p402 = pneg %p72
        %p403 = pneg %p103
        %p404 = pneg %p100
        %s405 = sand.u32 %s90, 1
        %s406 = scalar_lea.sflag [#allocation4], %s405
        %s407 = sand.u32 %s90, 1
        %s408 = smul.addr %s407, 312
        %s409 = scalar_lea.vmem [#allocation3], %s408
        %p410 = scmp.lt.s32.totalorder %s20, 0
        %s411 = scalar_select %p410, %s20, 0
        %s412 = smul.addr %s411, 52
        %s413 = smul.addr %s412, 4
        %s414 = scalar_lea.vmem %s0, %s413
        %v416 = vld [vmem:[%s414] sm:$0xff]
        %v417 = vld [vmem:[%s414 + $0x8] sm:$0xff]
        %v418 = vld [vmem:[%s414 + $0x10] sm:$0xff]
        %v419 = vld [vmem:[%s414 + $0x18] sm:$0xff]
        %v420 = vld [vmem:[%s414 + $0x20] sm:$0xff]
        %v421 = vld [vmem:[%s414 + $0x28] sm:$0xff]
        %v422 = vld [vmem:[%s414 + $0x30] sm:$0xff]
        %v423 = vld [vmem:[%s414 + $0x38] sm:$0xff]
        %v424 = vld [vmem:[%s414 + $0x40] sm:$0xff]
        %v425 = vld [vmem:[%s414 + $0x48] sm:$0xff]
        %v426 = vld [vmem:[%s414 + $0x50] sm:$0xff]
        %v427 = vld [vmem:[%s414 + $0x58] sm:$0xff]
        %v428 = vld [vmem:[%s414 + $0x60] sm:$0xff]
        %v429 = vld [vmem:[%s414 + $0x68] sm:$0xff]
        %v430 = vld [vmem:[%s414 + $0x70] sm:$0xff]
        %v431 = vld [vmem:[%s414 + $0x78] sm:$0xff]
        %v432 = vld [vmem:[%s414 + $0x80] sm:$0xff]
        %v433 = vld [vmem:[%s414 + $0x88] sm:$0xff]
        %v434 = vld [vmem:[%s414 + $0x90] sm:$0xff]
        %v435 = vld [vmem:[%s414 + $0x98] sm:$0xff]
        %v436 = vld [vmem:[%s414 + $0xa0] sm:$0xff]
        %v437 = vld [vmem:[%s414 + $0xa8] sm:$0xff]
        %v438 = vld [vmem:[%s414 + $0xb0] sm:$0xff]
        %v439 = vld [vmem:[%s414 + $0xb8] sm:$0xff]
        %v440 = vld [vmem:[%s414 + $0xc0] sm:$0xff]
        %v441 = vld [vmem:[%s414 + $0xc8] sm:$0xff]
        %v442 = vld [vmem:[%s386] sm:$0xf]
        %v443 = vld [vmem:[%s386 + $0x4] sm:$0xf]
        %v444 = vld [vmem:[%s386 + $0x8] sm:$0xf]
        %v445 = vld [vmem:[%s386 + $0xc] sm:$0xf]
        %v446 = vld [vmem:[%s386 + $0x10] sm:$0xf]
        %v447 = vld [vmem:[%s386 + $0x14] sm:$0xf]
        %v448 = vld [vmem:[%s386 + $0x18] sm:$0xf]
        %v449 = vld [vmem:[%s386 + $0x1c] sm:$0xf]
        %v450 = vld [vmem:[%s386 + $0x20] sm:$0xf]
        %v451 = vld [vmem:[%s386 + $0x24] sm:$0xf]
        %v452 = vld [vmem:[%s386 + $0x28] sm:$0xf]
        %v453 = vld [vmem:[%s386 + $0x2c] sm:$0xf]
        %v454 = vld [vmem:[%s386 + $0x30] sm:$0xf]
        %v455 = vld [vmem:[%s386 + $0x34] sm:$0xf]
        %v456 = vld [vmem:[%s386 + $0x38] sm:$0xf]
        %v457 = vld [vmem:[%s386 + $0x3c] sm:$0xf]
        %v458 = vld [vmem:[%s386 + $0x40] sm:$0xf]
        %v459 = vld [vmem:[%s386 + $0x44] sm:$0xf]
        %v460 = vld [vmem:[%s386 + $0x48] sm:$0xf]
        %v461 = vld [vmem:[%s386 + $0x4c] sm:$0xf]
        %v462 = vld [vmem:[%s386 + $0x50] sm:$0xf]
        %v463 = vld [vmem:[%s386 + $0x54] sm:$0xf]
        %v464 = vld [vmem:[%s386 + $0x58] sm:$0xf]
        %v465 = vld [vmem:[%s386 + $0x5c] sm:$0xf]
        %v466 = vld [vmem:[%s386 + $0x60] sm:$0xf]
        %v467 = vld [vmem:[%s386 + $0x64] sm:$0xf]
        %v468 = vld [vmem:[%s386 + $0x68] sm:$0xf]
        %v469 = vld [vmem:[%s386 + $0x6c] sm:$0xf]
        %v470 = vld [vmem:[%s386 + $0x70] sm:$0xf]
        %v471 = vld [vmem:[%s386 + $0x74] sm:$0xf]
        %v472 = vld [vmem:[%s386 + $0x78] sm:$0xf]
        %v473 = vld [vmem:[%s386 + $0x7c] sm:$0xf]
        %v474 = vld [vmem:[%s386 + $0x80] sm:$0xf]
        %v475 = vld [vmem:[%s386 + $0x84] sm:$0xf]
        %v476 = vld [vmem:[%s386 + $0x88] sm:$0xf]
        %v477 = vld [vmem:[%s386 + $0x8c] sm:$0xf]
        %v478 = vld [vmem:[%s386 + $0x90] sm:$0xf]
        %v479 = vld [vmem:[%s386 + $0x94] sm:$0xf]
        %v480 = vld [vmem:[%s386 + $0x98] sm:$0xf]
        %v481 = vld [vmem:[%s386 + $0x9c] sm:$0xf]
        %v482 = vld [vmem:[%s386 + $0xa0] sm:$0xf]
        %v483 = vld [vmem:[%s386 + $0xa4] sm:$0xf]
        %v484 = vld [vmem:[%s386 + $0xa8] sm:$0xf]
        %v485 = vld [vmem:[%s386 + $0xac] sm:$0xf]
        %v486 = vld [vmem:[%s386 + $0xb0] sm:$0xf]
        %v487 = vld [vmem:[%s386 + $0xb4] sm:$0xf]
        %v488 = vld [vmem:[%s386 + $0xb8] sm:$0xf]
        %v489 = vld [vmem:[%s386 + $0xbc] sm:$0xf]
        %v490 = vld [vmem:[%s386 + $0xc0] sm:$0xf]
        %v491 = vld [vmem:[%s386 + $0xc4] sm:$0xf]
        %v518 = vunpack.c.l.b16 %v416
        %v519 = vunpack.c.h.b16 %v416
        %v520 = vunpack.c.l.b16 %v417
        %v521 = vunpack.c.h.b16 %v417
        %v522 = vunpack.c.l.b16 %v418
        %v523 = vunpack.c.h.b16 %v418
        %v524 = vunpack.c.l.b16 %v419
        %v525 = vunpack.c.h.b16 %v419
        %v526 = vunpack.c.l.b16 %v420
        %v527 = vunpack.c.h.b16 %v420
        %v528 = vunpack.c.l.b16 %v421
        %v529 = vunpack.c.h.b16 %v421
        %v530 = vunpack.c.l.b16 %v422
        %v531 = vunpack.c.h.b16 %v422
        %v532 = vunpack.c.l.b16 %v423
        %v533 = vunpack.c.h.b16 %v423
        %v534 = vunpack.c.l.b16 %v424
        %v535 = vunpack.c.h.b16 %v424
        %v536 = vunpack.c.l.b16 %v425
        %v537 = vunpack.c.h.b16 %v425
        %v538 = vunpack.c.l.b16 %v426
        %v539 = vunpack.c.h.b16 %v426
        %v540 = vunpack.c.l.b16 %v427
        %v541 = vunpack.c.h.b16 %v427
        %v542 = vunpack.c.l.b16 %v428
        %v543 = vunpack.c.h.b16 %v428
        %v544 = vunpack.c.l.b16 %v429
        %v545 = vunpack.c.h.b16 %v429
        %v546 = vunpack.c.l.b16 %v430
        %v547 = vunpack.c.h.b16 %v430
        %v548 = vunpack.c.l.b16 %v431
        %v549 = vunpack.c.h.b16 %v431
        %v550 = vunpack.c.l.b16 %v432
        %v551 = vunpack.c.h.b16 %v432
        %v552 = vunpack.c.l.b16 %v433
        %v553 = vunpack.c.h.b16 %v433
        %v554 = vunpack.c.l.b16 %v434
        %v555 = vunpack.c.h.b16 %v434
        %v556 = vunpack.c.l.b16 %v435
        %v557 = vunpack.c.h.b16 %v435
        %v558 = vunpack.c.l.b16 %v436
        %v559 = vunpack.c.h.b16 %v436
        %v560 = vunpack.c.l.b16 %v437
        %v561 = vunpack.c.h.b16 %v437
        %v562 = vunpack.c.l.b16 %v438
        %v563 = vunpack.c.h.b16 %v438
        %v564 = vunpack.c.l.b16 %v439
        %v565 = vunpack.c.h.b16 %v439
        %v566 = vunpack.c.l.b16 %v440
        %v567 = vunpack.c.h.b16 %v440
        %v568 = vunpack.c.l.b16 %v441
        %v569 = vunpack.c.h.b16 %v441
        %v570 = vpack.c.b16 %v522, %v518
        %v571 = vpack.c.b16 %v523, %v519
        %v572 = vpack.c.b16 %v524, %v520
        %v573 = vpack.c.b16 %v525, %v521
        %v574 = vpack.c.b16 %v530, %v526
        %v575 = vpack.c.b16 %v531, %v527
        %v576 = vpack.c.b16 %v532, %v528
        %v577 = vpack.c.b16 %v533, %v529
        %v578 = vpack.c.b16 %v538, %v534
        %v579 = vpack.c.b16 %v539, %v535
        %v580 = vpack.c.b16 %v540, %v536
        %v581 = vpack.c.b16 %v541, %v537
        %v582 = vpack.c.b16 %v546, %v542
        %v583 = vpack.c.b16 %v547, %v543
        %v584 = vpack.c.b16 %v548, %v544
        %v585 = vpack.c.b16 %v549, %v545
        %v586 = vpack.c.b16 %v554, %v550
        %v587 = vpack.c.b16 %v555, %v551
        %v588 = vpack.c.b16 %v556, %v552
        %v589 = vpack.c.b16 %v557, %v553
        %v590 = vpack.c.b16 %v562, %v558
        %v591 = vpack.c.b16 %v563, %v559
        %v592 = vpack.c.b16 %v564, %v560
        %v593 = vpack.c.b16 %v565, %v561
        %v594 = vpack.c.b16 %v566, %v566
        %v595 = vpack.c.b16 %v567, %v567
        %v596 = vpack.c.b16 %v568, %v568
        %v597 = vpack.c.b16 %v569, %v569
        %v669 = vunpack.c.l.b16 %v442
        %v670 = vunpack.c.l.b16 %v443
        %v671 = vunpack.c.l.b16 %v444
        %v672 = vunpack.c.l.b16 %v445
        %v673 = vunpack.c.l.b16 %v446
        %v674 = vunpack.c.l.b16 %v447
        %v675 = vunpack.c.l.b16 %v448
        %v676 = vunpack.c.l.b16 %v449
        %v677 = vunpack.c.l.b16 %v450
        %v678 = vunpack.c.l.b16 %v451
        %v679 = vunpack.c.l.b16 %v452
        %v680 = vunpack.c.l.b16 %v453
        %v681 = vunpack.c.l.b16 %v454
        %v682 = vunpack.c.l.b16 %v455
        %v683 = vunpack.c.l.b16 %v456
        %v684 = vunpack.c.l.b16 %v457
        %v685 = vunpack.c.l.b16 %v458
        %v686 = vunpack.c.l.b16 %v459
        %v687 = vunpack.c.l.b16 %v460
        %v688 = vunpack.c.l.b16 %v461
        %v689 = vunpack.c.l.b16 %v462
        %v690 = vunpack.c.l.b16 %v463
        %v691 = vunpack.c.l.b16 %v464
        %v692 = vunpack.c.l.b16 %v465
        %v693 = vunpack.c.l.b16 %v466
        %v694 = vunpack.c.l.b16 %v467
        %v695 = vunpack.c.l.b16 %v468
        %v696 = vunpack.c.l.b16 %v469
        %v697 = vunpack.c.l.b16 %v470
        %v698 = vunpack.c.l.b16 %v471
        %v699 = vunpack.c.l.b16 %v472
        %v700 = vunpack.c.l.b16 %v473
        %v701 = vunpack.c.l.b16 %v474
        %v702 = vunpack.c.l.b16 %v475
        %v703 = vunpack.c.l.b16 %v476
        %v704 = vunpack.c.l.b16 %v477
        %v705 = vunpack.c.l.b16 %v478
        %v706 = vunpack.c.l.b16 %v479
        %v707 = vunpack.c.l.b16 %v480
        %v708 = vunpack.c.l.b16 %v481
        %v709 = vunpack.c.l.b16 %v482
        %v710 = vunpack.c.l.b16 %v483
        %v711 = vunpack.c.l.b16 %v484
        %v712 = vunpack.c.l.b16 %v485
        %v713 = vunpack.c.l.b16 %v486
        %v714 = vunpack.c.l.b16 %v487
        %v715 = vunpack.c.l.b16 %v488
        %v716 = vunpack.c.l.b16 %v489
        %v717 = vunpack.c.l.b16 %v490
        %v718 = vunpack.c.l.b16 %v491
        %v719 = vpack.c.b16 %v670, %v669
        %v720 = vpack.c.b16 %v672, %v671
        %v721 = vpack.c.b16 %v674, %v673
        %v722 = vpack.c.b16 %v676, %v675
        %v723 = vpack.c.b16 %v678, %v677
        %v724 = vpack.c.b16 %v680, %v679
        %v725 = vpack.c.b16 %v682, %v681
        %v726 = vpack.c.b16 %v684, %v683
        %v727 = vpack.c.b16 %v686, %v685
        %v728 = vpack.c.b16 %v688, %v687
        %v729 = vpack.c.b16 %v690, %v689
        %v730 = vpack.c.b16 %v692, %v691
        %v731 = vpack.c.b16 %v694, %v693
        %v732 = vpack.c.b16 %v696, %v695
        %v733 = vpack.c.b16 %v698, %v697
        %v734 = vpack.c.b16 %v700, %v699
        %v735 = vpack.c.b16 %v702, %v701
        %v736 = vpack.c.b16 %v704, %v703
        %v737 = vpack.c.b16 %v706, %v705
        %v738 = vpack.c.b16 %v708, %v707
        %v739 = vpack.c.b16 %v710, %v709
        %v740 = vpack.c.b16 %v712, %v711
        %v741 = vpack.c.b16 %v714, %v713
        %v742 = vpack.c.b16 %v716, %v715
        %v743 = vpack.c.b16 %v718, %v717
        %vm769 = vcmask 130048
        %v771 = vsel %vm769, %v573, 0
        %v774 = vsel %vm769, %v577, 0
        %v777 = vsel %vm769, %v581, 0
        %v780 = vsel %vm769, %v585, 0
        %v783 = vsel %vm769, %v589, 0
        %v786 = vsel %vm769, %v593, 0
        %v789 = vsel %vm769, %v597, 0
        %791 = vmatprep.subr.bf16.mxu0 0
        %792 = vmatpush1.bf16.msra.mxu0 %v726
        %793 = vmatprep.subr.bf16.mxu0 0
        %794 = vmatpush1.bf16.msra.mxu0 %v725
        %795 = vmatprep.subr.bf16.mxu0 0
        %796 = vmatpush1.bf16.msra.mxu0 %v724
        %797 = vmatprep.subr.bf16.mxu0 0
        %798 = vmatpush1.bf16.msra.mxu0 %v723
        %799 = vmatprep.subr.bf16.mxu0 0
        %800 = vmatpush1.bf16.msra.mxu0 %v722
        %801 = vmatprep.subr.bf16.mxu0 0
        %802 = vmatpush1.bf16.msra.mxu0 %v721
        %803 = vmatprep.subr.bf16.mxu0 0
        %804 = vmatpush1.bf16.msra.mxu0 %v720
        %805 = vmatprep.subr.bf16.mxu0 0
        %806 = vmatpush1.bf16.msra.mxu0 %v719
        %807 = vmatprep.subr.bf16.mxu0 0
        %808 = vmatpush2.bf16.msra.mxu0 %v734
        %809 = vmatprep.subr.bf16.mxu0 0
        %810 = vmatpush2.bf16.msra.mxu0 %v733
        %811 = vmatprep.subr.bf16.mxu0 0
        %812 = vmatpush2.bf16.msra.mxu0 %v732
        %813 = vmatprep.subr.bf16.mxu0 0
        %814 = vmatpush2.bf16.msra.mxu0 %v731
        %815 = vmatprep.subr.bf16.mxu0 0
        %816 = vmatpush2.bf16.msra.mxu0 %v730
        %817 = vmatprep.subr.bf16.mxu0 0
        %818 = vmatpush2.bf16.msra.mxu0 %v729
        %819 = vmatprep.subr.bf16.mxu0 0
        %820 = vmatpush2.bf16.msra.mxu0 %v728
        %821 = vmatprep.subr.bf16.mxu0 0
        %822 = vmatpush2.bf16.msra.mxu0 %v727
        %823 = vmatprep.mubr.bf16.mxu0 %v571
        %824 = vmatmul.mubr.bf16.gmra.mxu0 %v570
        %v825 = vpop.f32.mrf.mxu0
        %v826 = vadd.f32 0.0, %v825
        %v827 = vpop.f32.mrf.mxu0
        %v828 = vpop.f32.mrf.mxu0
        %v829 = vadd.f32 0.0, %v828
        %v830 = vpop.f32.mrf.mxu0
        %831 = vmatprep.mubr.bf16.mxu0 %v575
        %832 = vmatmul.mubr.bf16.gmra.mxu0 %v574
        %v833 = vpop.f32.mrf.mxu0
        %v834 = vadd.f32 0.0, %v833
        %v835 = vpop.f32.mrf.mxu0
        %v836 = vpop.f32.mrf.mxu0
        %v837 = vadd.f32 0.0, %v836
        %v838 = vpop.f32.mrf.mxu0
        %839 = vmatprep.mubr.bf16.mxu0 %v579
        %840 = vmatmul.mubr.bf16.gmra.mxu0 %v578
        %v841 = vpop.f32.mrf.mxu0
        %v842 = vadd.f32 0.0, %v841
        %v843 = vpop.f32.mrf.mxu0
        %v844 = vpop.f32.mrf.mxu0
        %v845 = vadd.f32 0.0, %v844
        %v846 = vpop.f32.mrf.mxu0
        %847 = vmatprep.mubr.bf16.mxu0 %v583
        %848 = vmatmul.mubr.bf16.gmra.mxu0 %v582
        %v849 = vpop.f32.mrf.mxu0
        %v850 = vadd.f32 0.0, %v849
        %v851 = vpop.f32.mrf.mxu0
        %v852 = vpop.f32.mrf.mxu0
        %v853 = vadd.f32 0.0, %v852
        %v854 = vpop.f32.mrf.mxu0
        %855 = vmatprep.mubr.bf16.mxu0 %v587
        %856 = vmatmul.mubr.bf16.gmra.mxu0 %v586
        %v857 = vpop.f32.mrf.mxu0
        %v858 = vadd.f32 0.0, %v857
        %v859 = vpop.f32.mrf.mxu0
        %v860 = vpop.f32.mrf.mxu0
        %v861 = vadd.f32 0.0, %v860
        %v862 = vpop.f32.mrf.mxu0
        %863 = vmatprep.mubr.bf16.mxu0 %v591
        %864 = vmatmul.mubr.bf16.gmra.mxu0 %v590
        %v865 = vpop.f32.mrf.mxu0
        %v866 = vadd.f32 0.0, %v865
        %v867 = vpop.f32.mrf.mxu0
        %v868 = vpop.f32.mrf.mxu0
        %v869 = vadd.f32 0.0, %v868
        %v870 = vpop.f32.mrf.mxu0
        %871 = vmatprep.mubr.bf16.mxu0 %v595
        %872 = vmatmul.mubr.bf16.gmra.mxu0 %v594
        %v873 = vpop.f32.mrf.mxu0
        %v874 = vadd.f32 0.0, %v873
        %v875 = vpop.f32.mrf.mxu0
        %v876 = vpop.f32.mrf.mxu0
        %v877 = vpop.f32.mrf.mxu0
        %878 = vdwg.mxu0
        %879 = vmatprep.subr.bf16.mxu0 0
        %880 = vmatpush1.bf16.msra.mxu0 %v742
        %881 = vmatprep.subr.bf16.mxu0 0
        %882 = vmatpush1.bf16.msra.mxu0 %v741
        %883 = vmatprep.subr.bf16.mxu0 0
        %884 = vmatpush1.bf16.msra.mxu0 %v740
        %885 = vmatprep.subr.bf16.mxu0 0
        %886 = vmatpush1.bf16.msra.mxu0 %v739
        %887 = vmatprep.subr.bf16.mxu0 0
        %888 = vmatpush1.bf16.msra.mxu0 %v738
        %889 = vmatprep.subr.bf16.mxu0 0
        %890 = vmatpush1.bf16.msra.mxu0 %v737
        %891 = vmatprep.subr.bf16.mxu0 0
        %892 = vmatpush1.bf16.msra.mxu0 %v736
        %893 = vmatprep.subr.bf16.mxu0 0
        %894 = vmatpush1.bf16.msra.mxu0 %v735
        %895 = vmatprep.subr.bf16.mxu0 0
        %896 = vmatpush2.bf16.msra.mxu0 0
        %897 = vmatprep.subr.bf16.mxu0 0
        %898 = vmatpush2.bf16.msra.mxu0 0
        %899 = vmatprep.subr.bf16.mxu0 0
        %900 = vmatpush2.bf16.msra.mxu0 0
        %901 = vmatprep.subr.bf16.mxu0 0
        %902 = vmatpush2.bf16.msra.mxu0 0
        %903 = vmatprep.subr.bf16.mxu0 0
        %904 = vmatpush2.bf16.msra.mxu0 0
        %905 = vmatprep.subr.bf16.mxu0 0
        %906 = vmatpush2.bf16.msra.mxu0 0
        %907 = vmatprep.subr.bf16.mxu0 0
        %908 = vmatpush2.bf16.msra.mxu0 0
        %909 = vmatprep.subr.bf16.mxu0 0
        %910 = vmatpush2.bf16.msra.mxu0 %v743
        %911 = vmatprep.mubr.bf16.mxu0 %v771
        %912 = vmatmul.mubr.bf16.gmra.mxu0 %v572
        %v913 = vpop.f32.mrf.mxu0
        %v914 = vadd.f32 %v826, %v913
        %v915 = vpop.f32.mrf.mxu0
        %v916 = vpop.f32.mrf.mxu0
        %v917 = vadd.f32 %v829, %v916
        %v918 = vpop.f32.mrf.mxu0
        %919 = vmatprep.mubr.bf16.mxu0 %v774
        %920 = vmatmul.mubr.bf16.gmra.mxu0 %v576
        %v921 = vpop.f32.mrf.mxu0
        %v922 = vadd.f32 %v834, %v921
        %v923 = vpop.f32.mrf.mxu0
        %v924 = vpop.f32.mrf.mxu0
        %v925 = vadd.f32 %v837, %v924
        %v926 = vpop.f32.mrf.mxu0
        %927 = vmatprep.mubr.bf16.mxu0 %v777
        %928 = vmatmul.mubr.bf16.gmra.mxu0 %v580
        %v929 = vpop.f32.mrf.mxu0
        %v930 = vadd.f32 %v842, %v929
        %v931 = vpop.f32.mrf.mxu0
        %v932 = vpop.f32.mrf.mxu0
        %v933 = vadd.f32 %v845, %v932
        %v934 = vpop.f32.mrf.mxu0
        %935 = vmatprep.mubr.bf16.mxu0 %v780
        %936 = vmatmul.mubr.bf16.gmra.mxu0 %v584
        %v937 = vpop.f32.mrf.mxu0
        %v938 = vadd.f32 %v850, %v937
        %v939 = vpop.f32.mrf.mxu0
        %v940 = vpop.f32.mrf.mxu0
        %v941 = vadd.f32 %v853, %v940
        %v942 = vpop.f32.mrf.mxu0
        %943 = vmatprep.mubr.bf16.mxu0 %v783
        %944 = vmatmul.mubr.bf16.gmra.mxu0 %v588
        %v945 = vpop.f32.mrf.mxu0
        %v946 = vadd.f32 %v858, %v945
        %v947 = vpop.f32.mrf.mxu0
        %v948 = vpop.f32.mrf.mxu0
        %v949 = vadd.f32 %v861, %v948
        %v950 = vpop.f32.mrf.mxu0
        %951 = vmatprep.mubr.bf16.mxu0 %v786
        %952 = vmatmul.mubr.bf16.gmra.mxu0 %v592
        %v953 = vpop.f32.mrf.mxu0
        %v954 = vadd.f32 %v866, %v953
        %v955 = vpop.f32.mrf.mxu0
        %v956 = vpop.f32.mrf.mxu0
        %v957 = vadd.f32 %v869, %v956
        %v958 = vpop.f32.mrf.mxu0
        %959 = vmatprep.mubr.bf16.mxu0 %v789
        %960 = vmatmul.mubr.bf16.gmra.mxu0 %v596
        %v961 = vpop.f32.mrf.mxu0
        %v962 = vadd.f32 %v874, %v961
        %v963 = vpop.f32.mrf.mxu0
        %v964 = vpop.f32.mrf.mxu0
        %v965 = vpop.f32.mrf.mxu0
        %966 = vdwg.mxu0
        %967 = vst [vmem:[%s409] sm:$0xff] %v914
        %968 = vst [vmem:[%s409 + $0x8] sm:$0xff] %v917
        %969 = vst [vmem:[%s409 + $0x10] sm:$0xff] %v922
        %970 = vst [vmem:[%s409 + $0x18] sm:$0xff] %v925
        %971 = vst [vmem:[%s409 + $0x20] sm:$0xff] %v930
        %972 = vst [vmem:[%s409 + $0x28] sm:$0xff] %v933
        %973 = vst [vmem:[%s409 + $0x30] sm:$0xff] %v938
        %974 = vst [vmem:[%s409 + $0x38] sm:$0xff] %v941
        %975 = vst [vmem:[%s409 + $0x40] sm:$0xff] %v946
        %976 = vst [vmem:[%s409 + $0x48] sm:$0xff] %v949
        %977 = vst [vmem:[%s409 + $0x50] sm:$0xff] %v954
        %978 = vst [vmem:[%s409 + $0x58] sm:$0xff] %v957
        %979 = vst [vmem:[%s409 + $0x60] sm:$0xff] %v962
        %980 = vst [vmem:[%s409 + $0x68] sm:$0xff] %v914
        %981 = vst [vmem:[%s409 + $0x70] sm:$0xff] %v917
        %982 = vst [vmem:[%s409 + $0x78] sm:$0xff] %v922
        %983 = vst [vmem:[%s409 + $0x80] sm:$0xff] %v925
        %984 = vst [vmem:[%s409 + $0x88] sm:$0xff] %v930
        %985 = vst [vmem:[%s409 + $0x90] sm:$0xff] %v933
        %986 = vst [vmem:[%s409 + $0x98] sm:$0xff] %v938
        %987 = vst [vmem:[%s409 + $0xa0] sm:$0xff] %v941
        %988 = vst [vmem:[%s409 + $0xa8] sm:$0xff] %v946
        %989 = vst [vmem:[%s409 + $0xb0] sm:$0xff] %v949
        %990 = vst [vmem:[%s409 + $0xb8] sm:$0xff] %v954
        %991 = vst [vmem:[%s409 + $0xc0] sm:$0xff] %v957
        %992 = vst [vmem:[%s409 + $0xc8] sm:$0xff] %v962
        %993 = vst [vmem:[%s409 + $0xd0] sm:$0xff] %v914
        %994 = vst [vmem:[%s409 + $0xd8] sm:$0xff] %v917
        %995 = vst [vmem:[%s409 + $0xe0] sm:$0xff] %v922
        %996 = vst [vmem:[%s409 + $0xe8] sm:$0xff] %v925
        %997 = vst [vmem:[%s409 + $0xf0] sm:$0xff] %v930
        %998 = vst [vmem:[%s409 + $0xf8] sm:$0xff] %v933
        %999 = vst [vmem:[%s409 + $0x100] sm:$0xff] %v938
        %1000 = vst [vmem:[%s409 + $0x108] sm:$0xff] %v941
        %1001 = vst [vmem:[%s409 + $0x110] sm:$0xff] %v946
        %1002 = vst [vmem:[%s409 + $0x118] sm:$0xff] %v949
        %1003 = vst [vmem:[%s409 + $0x120] sm:$0xff] %v954
        %1004 = vst [vmem:[%s409 + $0x128] sm:$0xff] %v957
        %1005 = vst [vmem:[%s409 + $0x130] sm:$0xff] %v962
        %s1006 = sand.u32 %s90, 1
        %s1007 = scalar_lea.sflag [#allocation4], %s1006
        %s1008 = sand.u32 %s90, 1
        %s1009 = smul.addr %s1008, 312
        %s1010 = scalar_lea.vmem [#allocation3], %s1009
        // Predicated region
        $region70: #{tpu_custom_call.1} parent=64 // pred_check
          %p1011 = pneg %p100
        $region71: #{tpu_custom_call.1} parent=64 // pred_check_branch
          %1013 = sbr.rel (%p1011) target = $region73
        $region72: #{tpu_custom_call.1} parent=64 // pred_region
          %s1015 = ssub.s32 4992, 4992
          %1016 = vsyncadd %s1007, %s1015
          %s1017 = smul.addr %s20, 78
          %s1018 = sadd.s32 %s21, %s1017
          %s1019 = smul.addr %s1018, 128
          %s1020 = scalar_lea.hbm %s2, %s1019
          %s1021 = sshll.u32 %s1010, 4
          %s1022 = int_to_ptr.vmem [resolvable:$true] %s1021
          %1027 = dma.vmem_to_hbm [thread:$0]  %s1022, 4992, %s1020, %s1007, 128, 256, 8
        $region73: #{tpu_custom_call.1} parent=64 // pred_fallthru
          _
      $region65: #{tpu_custom_call.1} parent=5 // pred_fallthru
        _
      %p1028 = scmp.le.s32.totalorder 2, %s11
      // Predicated region
      $region74: #{tpu_custom_call.1} parent=5 // pred_check
        %p1029 = pneg %p1028
      $region75: #{tpu_custom_call.1} parent=5 // pred_check_branch
        %1031 = sbr.rel (%p1029) target = $region77
      $region76: #{tpu_custom_call.1} parent=5 // pred_region
        %s1032 = ssub.s32 %s11, 2
        // Predicated region
        $region78: #{tpu_custom_call.1} parent=76 // pred_check
          %p1033 = pneg %p106
        $region79: #{tpu_custom_call.1} parent=76 // pred_check_branch
          %1035 = sbr.rel (%p1033) target = $region81
        $region80: #{tpu_custom_call.1} parent=76 // pred_region
          %s1036 = sand.u32 %s91, 1
          %s1037 = scalar_lea.sflag [#allocation4], %s1036
          %s1038 = sand.u32 %s91, 1
          %s1039 = smul.addr %s1038, 312
          %s1040 = scalar_lea.vmem [#allocation3], %s1039
          %1041 = dma.done %s1037, 4992
        $region81: #{tpu_custom_call.1} parent=76 // pred_fallthru
          _
      $region77: #{tpu_custom_call.1} parent=5 // pred_fallthru
        _
    $region6: #{tpu_custom_call.1} parent=1 // loop_footer
      %s15 = sadd.s32 1, %s11
    $region7: #{tpu_custom_call.1} parent=1 // loop_footer_branch
      %10 = sbr.rel target = $region3
    $region8: #{tpu_custom_call.1} parent=1 // loop_exit
      _
    %1042 = vsyncpa [#allocation4], 1
    %s1043 = scalar_lea.sflag [#allocation4], 1
    %1044 = vsyncpa %s1043, 1

</llo_original>
